<compile_context>
chip_gen: v7x
topology: tpu7x:2x2x1
jax: 0.10.0
libtpu: 0.0.40
codegen_flags: <defaults>
</compile_context>

<pallas_src>
import math
import functools

import jax
import jax.numpy as jnp
from jax.experimental import pallas as pl
from jax.experimental.pallas import tpu as pltpu


_NEG_LARGE = -1e30          # exp() underflows to exactly 0.0 in f32


def _nca_ml_ce_kernel(x_ref, eidx_ref, bm_ref, mtxT_ref, o_ref, acc_ref,
                      *, label_num, margin):
    ni = pl.program_id(1)

    @pl.when(ni == 0)
    def _init():
        acc_ref[...] = jnp.zeros_like(acc_ref)

    # Hot loop: exp on the EUP + one MXU matmul contracting the big N tile.
    e = jnp.exp(x_ref[...])                                   # (TB, TN) f32
    m = mtxT_ref[...].astype(jnp.float32)                     # (L+1, TN)
    acc_ref[...] += jax.lax.dot_general(
        e, m,
        dimension_numbers=(((1,), (1,)), ((), ())),           # e @ m.T
        preferred_element_type=jnp.float32)                   # (TB, L+1)

    @pl.when(ni == pl.num_programs(1) - 1)
    def _finalize():
        Lf = jnp.float32(label_num)
        acc = acc_ref[...]                                    # (TB, L+1)
        e_idx = eidx_ref[...]                                 # (TB, 1) = exp(x[i, idx_i])
        # bm_ref = [gathered +/-1 rows | L]  ->  bm_aug . acc
        #        = bm . (e @ mtx) + L * Z'   with Z' = sum_j e_ij (idx col incl.)
        # Reference zeroes e at column idx_i before both sums; since
        # mtx[idx_i] == bm_i and bm_i . bm_i == L:
        #   p = (bm.ew' + L*Z') / (2L) - e_idx,     Z = Z' - e_idx.
        s = jnp.sum(bm_ref[...] * acc, axis=1, keepdims=True)
        p = s / (jnp.float32(2.0) * Lf) - e_idx
        Z = acc[:, label_num:label_num + 1] - e_idx
        z_excl = Z - p
        p = p * jnp.float32(math.exp(-margin))
        z_fin = z_excl + p
        prob = p / z_fin
        # masked_select(prob, prob != 0).log(): zero terms contribute 0.
        o_ref[...] = jnp.where(prob != jnp.float32(0.0),
                               jnp.log(prob), jnp.float32(0.0))


def _round_up(x, m):
    return ((x + m - 1) // m) * m


def _vmem_capacity_bytes():
    try:
        cap = getattr(pltpu.get_tpu_info(), "vmem_capacity_bytes", None)
        if cap:
            return int(cap)
    except Exception:
        pass
    return 64 << 20          # conservative default (v7x per-TensorCore)


def _pick_tile_b(batch):
    """Split the batch only when each tile keeps >= 128 rows (so the duplicated
    multiHotMtx stream per batch tile is negligible); small batches stay as a
    single tile -> no doubled mtx traffic / step count on 1-TC parts."""
    if batch <= 256:
        return batch
    for tb in (512, 256, 128):
        if batch % tb == 0:
            return tb
    return batch


def _pick_tile_n(n, tile_b, budget_bytes, cap=8192):
    """Largest 128-aligned N tile whose double-buffered x (f32) + mtx (bf16,
    sublane-padded 11->16) stream fits the VMEM budget, capped at `cap`."""
    per_lane = 2 * (tile_b * 4 + 16 * 2)
    max_tn = max(128, (budget_bytes // per_lane) // 128 * 128)
    tn = min(max_tn, cap)
    n_lane = _round_up(n, 128)
    return n_lane if n_lane <= tn else tn


def _vmem_limit_bytes(tile_b, tile_n, cap):
    x_buf = 2 * tile_b * tile_n * 4            # double-buffered x tile (f32)
    m_buf = 2 * 16 * tile_n * 2                # double-buffered mtx tile (bf16)
    small = 8 * tile_b * 128 * 4 + (2 << 20)   # eidx/bm/out buffers, acc, slack
    need = x_buf + m_buf + small
    return int(min(cap, max(need, 32 << 20)))


def nca_ml_cross_entropy(x, indexes, multi_hot_pm1, margin=0.0):
    """x: (B, N) logits; indexes: (B,) int; multi_hot_pm1: (N, L) with entries
    exactly +/-1. Returns the scalar NCA-ML cross-entropy loss."""
    x = x.astype(jnp.float32)
    multi_hot_pm1 = multi_hot_pm1.astype(jnp.float32)
    B, N = x.shape
    L = multi_hot_pm1.shape[1]
    idx = indexes.astype(jnp.int32)

    vmem_cap = _vmem_capacity_bytes()
    budget = min(max(vmem_cap // 2 - (8 << 20), 16 << 20), 48 << 20)
    tile_b = _pick_tile_b(B)
    tile_n = _pick_tile_n(N, tile_b, budget)
    n_pad = _round_up(N, tile_n)
    nb = pl.cdiv(B, tile_b)
    nn = n_pad // tile_n

    # ---- one-time wrapper preprocessing (O(B*L) / O(N*L) XLA work) ---------
    # Pad logits with a huge negative so exp() of the padding is exactly 0.
    x_pad = jnp.pad(x, ((0, 0), (0, n_pad - N)), constant_values=_NEG_LARGE)
    # exp(x[i, idx_i]): the column the reference zeroes via scatter_.
    e_idx = jnp.exp(jnp.take_along_axis(x, idx[:, None], axis=1))        # (B, 1)
    # Gathered +/-1 rows augmented with the constant L (pairs with the ones
    # row of mtx^T so a single dot yields  bm.ew + L*Z').
    bm_aug = jnp.concatenate(
        [multi_hot_pm1[idx], jnp.full((B, 1), float(L), jnp.float32)],
        axis=1)                                                          # (B, L+1)
    # Lane-dense label matrix: transpose to (L, N), append ones row (-> Z),
    # zero-pad N, stream as bf16 (exact for +/-1 and 1).
    mtxT_aug = jnp.concatenate(
        [multi_hot_pm1.T, jnp.ones((1, N), jnp.float32)], axis=0)        # (L+1, N)
    mtxT_aug = jnp.pad(mtxT_aug, ((0, 0), (0, n_pad - N)))
    mtxT_aug = mtxT_aug.astype(jnp.bfloat16)

    kernel = functools.partial(_nca_ml_ce_kernel,
                               label_num=L, margin=float(margin))

    cost = pl.CostEstimate(
        flops=2 * B * n_pad * (L + 1),                 # e @ mtx^T
        transcendentals=B * n_pad + B,                 # exp + log
        bytes_accessed=4 * B * n_pad                   # x (f32)
                       + nb * 2 * (L + 1) * n_pad      # mtx^T (bf16) per batch tile
                       + 4 * B * (L + 4),              # e_idx, bm, out
    )

    log_terms = pl.pallas_call(
        kernel,
        out_shape=jax.ShapeDtypeStruct((B, 1), jnp.float32),
        grid_spec=pltpu.PrefetchScalarGridSpec(
            num_scalar_prefetch=0,
            grid=(nb, nn),                             # (parallel batch, N reduction)
            in_specs=[
                pl.BlockSpec((tile_b, tile_n), lambda bi, ni: (bi, ni)),   # x
                pl.BlockSpec((tile_b, 1),      lambda bi, ni: (bi, 0)),    # exp(x_idx)
                pl.BlockSpec((tile_b, L + 1),  lambda bi, ni: (bi, 0)),    # [bm | L]
                pl.BlockSpec((L + 1, tile_n),  lambda bi, ni: (0, ni)),    # mtx^T (+ones)
            ],
            out_specs=pl.BlockSpec((tile_b, 1), lambda bi, ni: (bi, 0)),
            scratch_shapes=[
                pltpu.VMEM((tile_b, L + 1), jnp.float32),  # [e@mtx | Z'] accumulator
            ],
        ),
        compiler_params=pltpu.CompilerParams(
            dimension_semantics=("parallel", "arbitrary"),
            vmem_limit_bytes=_vmem_limit_bytes(tile_b, tile_n, vmem_cap)),
        cost_estimate=cost,
    )(x_pad, e_idx, bm_aug, mtxT_aug)

    # Trivial final reduction + (-1/B) scaling in the wrapper.
    return -jnp.sum(log_terms) / jnp.float32(B)


def _reference(x, indexes, multi_hot_pm1, margin=0.0):
    B, N = x.shape
    L = multi_hot_pm1.shape[1]
    e = jnp.exp(x)
    bm = multi_hot_pm1[indexes]                       # (B, L)
    out = bm @ multi_hot_pm1.T                        # (B, N)
    w = (out + L) / (2.0 * L)
    e = e.at[jnp.arange(B), indexes].set(0.0)
    p = jnp.sum(e * w, axis=1)
    Z = jnp.sum(e, axis=1)
    Z_ex = Z - p
    p = p / math.exp(margin)
    Z = Z_ex + p
    prob = p / Z
    log_t = jnp.where(prob != 0.0, jnp.log(prob), 0.0)
    return -jnp.sum(log_t) / B


if __name__ == "__main__":
    key = jax.random.PRNGKey(0)
    k1, k2, k3 = jax.random.split(key, 3)

    # dataset size N, label count L, batch size B (N not a multiple of 128
    # exercises the wrapper-side padding path).
    N, L, B = 700, 10, 8
    margin = 0.5

    # Deterministic "parameters": multi-hot label matrix, 0 -> -1 as in __init__.
    multi_hot01 = jax.random.bernoulli(k1, 0.5, (N, L)).astype(jnp.float32)
    multi_hot_pm1 = jnp.where(multi_hot01 == 0.0, -1.0, 1.0).astype(jnp.float32)

    x = jax.random.normal(k2, (B, N), dtype=jnp.float32)
    indexes = jax.random.randint(k3, (B,), 0, N, dtype=jnp.int32)

    loss = nca_ml_cross_entropy(x, indexes, multi_hot_pm1, margin=margin)
    loss = jax.block_until_ready(loss)

    ref = jax.block_until_ready(_reference(x, indexes, multi_hot_pm1, margin=margin))
    assert jnp.allclose(loss, ref, rtol=1e-4, atol=1e-5), (loss, ref)

    print("KERNEL_OK")
</pallas_src>

<mosaic_0001>
module attributes {stable_mosaic.version = 11 : i64} {
  func.func @_nca_ml_ce_kernel(%arg0: i32, %arg1: i32, %arg2: memref<8x768xf32, #tpu.memory_space<vmem>>, %arg3: memref<8x1xf32, #tpu.memory_space<vmem>>, %arg4: memref<8x11xf32, #tpu.memory_space<vmem>>, %arg5: memref<11x768xbf16, #tpu.memory_space<vmem>>, %arg6: memref<8x1xf32, #tpu.memory_space<vmem>>, %arg7: memref<8x11xf32, #tpu.memory_space<vmem>>) attributes {dimension_semantics = [#tpu.dimension_semantics<parallel>, #tpu.dimension_semantics<arbitrary>], iteration_bounds = array<i64: 1, 1>, scalar_prefetch = 0 : i64, scratch_operands = 1 : i64, tpu.core_type = #tpu.core_type<tc>, window_params = [{transform_indices = @transform_0, window_bounds = array<i64: 8, 768>}, {transform_indices = @transform_1, window_bounds = array<i64: 8, 1>}, {transform_indices = @transform_2, window_bounds = array<i64: 8, 11>}, {transform_indices = @transform_3, window_bounds = array<i64: 11, 768>}, {transform_indices = @transform_4, window_bounds = array<i64: 8, 1>}]} {
    %c0_i32 = arith.constant 0 : i32
    %0 = arith.cmpi eq, %arg1, %c0_i32 : i32
    %1 = arith.extui %0 : i1 to i32
    %c0_i32_0 = arith.constant 0 : i32
    %2 = arith.cmpi ne, %1, %c0_i32_0 : i32
    scf.if %2 {
      %cst_10 = arith.constant 0.000000e+00 : f32
      %14 = vector.broadcast %cst_10 : f32 to vector<8x11xf32>
      %c0_11 = arith.constant 0 : index
      %c0_12 = arith.constant 0 : index
      %15 = vector.load %arg7[%c0_11, %c0_12] : memref<8x11xf32, #tpu.memory_space<vmem>>, vector<8x11xf32>
      tpu.vector_store %arg7[%c0_11, %c0_12], %14 {strides = array<i32>} : memref<8x11xf32, #tpu.memory_space<vmem>>, vector<8x11xf32>,
    } else {
    }
    %c0 = arith.constant 0 : index
    %c0_1 = arith.constant 0 : index
    %3 = vector.load %arg2[%c0, %c0_1] : memref<8x768xf32, #tpu.memory_space<vmem>>, vector<8x768xf32>
    %4 = math.exp %3 : vector<8x768xf32>
    %c0_2 = arith.constant 0 : index
    %c0_3 = arith.constant 0 : index
    %5 = vector.load %arg5[%c0_2, %c0_3] : memref<11x768xbf16, #tpu.memory_space<vmem>>, vector<11x768xbf16>
    %6 = arith.extf %5 : vector<11x768xbf16> to vector<11x768xf32>
    %c0_4 = arith.constant 0 : index
    %c0_5 = arith.constant 0 : index
    %7 = vector.load %arg7[%c0_4, %c0_5] : memref<8x11xf32, #tpu.memory_space<vmem>>, vector<8x11xf32>
    %cst = arith.constant dense<0.000000e+00> : vector<8x11xf32>
    %8 = tpu.matmul %4, %6, %cst {dimension_numbers = #tpu.dot_dimension_numbers<[1], [1], [0], [0], [0, 0, 1, 0], [], []>} : vector<8x768xf32>, vector<11x768xf32>, vector<8x11xf32> -> vector<8x11xf32>
    %9 = arith.addf %7, %8 : vector<8x11xf32>
    %c0_6 = arith.constant 0 : index
    %c0_7 = arith.constant 0 : index
    %10 = vector.load %arg7[%c0_6, %c0_7] : memref<8x11xf32, #tpu.memory_space<vmem>>, vector<8x11xf32>
    tpu.vector_store %arg7[%c0_6, %c0_7], %9 {strides = array<i32>} : memref<8x11xf32, #tpu.memory_space<vmem>>, vector<8x11xf32>,
    %c0_i32_8 = arith.constant 0 : i32
    %11 = arith.cmpi eq, %arg1, %c0_i32_8 : i32
    %12 = arith.extui %11 : i1 to i32
    %c0_i32_9 = arith.constant 0 : i32
    %13 = arith.cmpi ne, %12, %c0_i32_9 : i32
    scf.if %13 {
      %c0_10 = arith.constant 0 : index
      %c0_11 = arith.constant 0 : index
      %14 = vector.load %arg7[%c0_10, %c0_11] : memref<8x11xf32, #tpu.memory_space<vmem>>, vector<8x11xf32>
      %c0_12 = arith.constant 0 : index
      %c0_13 = arith.constant 0 : index
      %15 = vector.load %arg3[%c0_12, %c0_13] : memref<8x1xf32, #tpu.memory_space<vmem>>, vector<8x1xf32>
      %c0_14 = arith.constant 0 : index
      %c0_15 = arith.constant 0 : index
      %16 = vector.load %arg4[%c0_14, %c0_15] : memref<8x11xf32, #tpu.memory_space<vmem>>, vector<8x11xf32>
      %17 = arith.mulf %16, %14 : vector<8x11xf32>
      %cst_16 = arith.constant dense<0.000000e+00> : vector<8xf32>
      %18 = vector.multi_reduction <add>, %17, %cst_16 [1] : vector<8x11xf32> to vector<8xf32>
      %19 = vector.shape_cast %18 : vector<8xf32> to vector<8x1xf32>
      %cst_17 = arith.constant 2.000000e+00 : f32
      %cst_18 = arith.constant 1.000000e+01 : f32
      %20 = arith.mulf %cst_17, %cst_18 : f32
      %21 = vector.broadcast %20 : f32 to vector<8x1xf32>
      %22 = arith.divf %19, %21 : vector<8x1xf32>
      %23 = arith.subf %22, %15 : vector<8x1xf32>
      %24 = vector.extract_strided_slice %14 {offsets = [0, 10], sizes = [8, 1], strides = [1, 1]} : vector<8x11xf32> to vector<8x1xf32>
      %25 = arith.subf %24, %15 : vector<8x1xf32>
      %26 = arith.subf %25, %23 : vector<8x1xf32>
      %cst_19 = arith.constant 0.606530666 : f32
      %27 = vector.broadcast %cst_19 : f32 to vector<8x1xf32>
      %28 = arith.mulf %23, %27 : vector<8x1xf32>
      %29 = arith.addf %26, %28 : vector<8x1xf32>
      %30 = arith.divf %28, %29 : vector<8x1xf32>
      %cst_20 = arith.constant 0.000000e+00 : f32
      %31 = vector.broadcast %cst_20 : f32 to vector<8x1xf32>
      %32 = arith.cmpf one, %30, %31 : vector<8x1xf32>
      %33 = math.log %30 : vector<8x1xf32>
      %cst_21 = arith.constant 0.000000e+00 : f32
      %34 = vector.broadcast %cst_21 : f32 to vector<8x1xf32>
      %35 = arith.select %32, %33, %34 : vector<8x1xi1>, vector<8x1xf32>
      %c0_22 = arith.constant 0 : index
      %c0_23 = arith.constant 0 : index
      %36 = vector.load %arg6[%c0_22, %c0_23] : memref<8x1xf32, #tpu.memory_space<vmem>>, vector<8x1xf32>
      tpu.vector_store %arg6[%c0_22, %c0_23], %35 {strides = array<i32>} : memref<8x1xf32, #tpu.memory_space<vmem>>, vector<8x1xf32>,
    } else {
    }
    return
  }
  func.func @transform_0(%arg0: i32, %arg1: i32) -> (i32, i32) {
    %c0_i32 = arith.constant 0 : i32
    return %arg0, %arg1 : i32, i32
  }
  func.func @transform_1(%arg0: i32, %arg1: i32) -> (i32, i32) {
    %c0_i32 = arith.constant 0 : i32
    %c0_i32_0 = arith.constant 0 : i32
    return %arg0, %c0_i32 : i32, i32
  }
  func.func @transform_2(%arg0: i32, %arg1: i32) -> (i32, i32) {
    %c0_i32 = arith.constant 0 : i32
    %c0_i32_0 = arith.constant 0 : i32
    return %arg0, %c0_i32 : i32, i32
  }
  func.func @transform_3(%arg0: i32, %arg1: i32) -> (i32, i32) {
    %c0_i32 = arith.constant 0 : i32
    %c0_i32_0 = arith.constant 0 : i32
    return %c0_i32, %arg1 : i32, i32
  }
  func.func @transform_4(%arg0: i32, %arg1: i32) -> (i32, i32) {
    %c0_i32 = arith.constant 0 : i32
    %c0_i32_0 = arith.constant 0 : i32
    return %arg0, %c0_i32 : i32, i32
  }
}

</mosaic_0001>

<llo_original>
// kernel: tpu_custom_call.1
$region0: #{tpu_custom_call.1}
  #allocation0 [shape = 'u32[]', space=smem, size = 0x4, offset = 0x4, fixed_abs, tag = 'smem constant byte address 0x4 - core index']
  #allocation1 [shape = 'u32[144,128]{1,0:T(1,128)}', space=vmem, size = 0x12000, scoped, tag = 'internal scratch']
  #allocation2 [shape = 'f32[8,11]{1,0:T(8,128)}', space=vmem, size = 0x1000, scoped, tag = 'scratch operand']
  %s0 = inlined_call_operand.hbm [shape: f32[8,768], index: 0, kind: input, shape index: {}]
  %s1 = inlined_call_operand.vmem [shape: f32[8,1], index: 1, kind: input, shape index: {}]
  %s2 = inlined_call_operand.vmem [shape: f32[8,11], index: 2, kind: input, shape index: {}]
  %s3 = inlined_call_operand.hbm [shape: bf16[11,768], index: 3, kind: input, shape index: {}]
  %s4 = inlined_call_operand.vmem [shape: f32[8,1], index: 4, kind: output, shape index: {}]
  %s5 = sld [smem:[#allocation0]]
  $region42: #{tpu_custom_call.1} parent=0
    _
  %s7 = ssub.s32 1, %s5
  %s8 = scalar_select 0, %s7, %s5
  $region1: #{tpu_custom_call.1} parent=0
    #allocation3 [shape = 'u8[24576]{0}', space=vmem, size = 0x6000, scoped, tag = 'input window, operand 0, single buffered']
    #allocation4 [shape = 's32[1]{0}', space=sflag, size = 0x4, scoped, tag = 'scoped memory for tpu_custom_call.1']
    #allocation5 [shape = 'u8[24576]{0}', space=vmem, size = 0x6000, scoped, tag = 'input window, operand 3, single buffered']
    #allocation6 [shape = 's32[1]{0}', space=sflag, size = 0x4, scoped, tag = 'scoped memory for tpu_custom_call.1']
    %9 = vsyncpa [#allocation4], 0
    %10 = vsyncpa [#allocation6], 0
    // Predicated region
    $region2: #{tpu_custom_call.1} parent=1 // pred_check
      _
    $region3: #{tpu_custom_call.1} parent=1 // pred_check_branch
      %12 = sbr.rel (0) target = $region5
    $region4: #{tpu_custom_call.1} parent=1 // pred_region
      %s14 = ssub.s32 768, 768
      %15 = vsyncadd [#allocation4], %s14
      %s17 = sshll.u32 [#allocation3], 4
      %s18 = int_to_ptr.vmem [resolvable:$true] %s17
      %20 = dma.hbm_to_vmem [thread:$0]  %s0, 768, %s18, [#allocation4]
    $region5: #{tpu_custom_call.1} parent=1 // pred_fallthru
      _
    // Predicated region
    $region6: #{tpu_custom_call.1} parent=1 // pred_check
      _
    $region7: #{tpu_custom_call.1} parent=1 // pred_check_branch
      %22 = sbr.rel (0) target = $region9
    $region8: #{tpu_custom_call.1} parent=1 // pred_region
      _
    $region9: #{tpu_custom_call.1} parent=1 // pred_fallthru
      _
    // Predicated region
    $region10: #{tpu_custom_call.1} parent=1 // pred_check
      _
    $region11: #{tpu_custom_call.1} parent=1 // pred_check_branch
      %24 = sbr.rel (0) target = $region13
    $region12: #{tpu_custom_call.1} parent=1 // pred_region
      _
    $region13: #{tpu_custom_call.1} parent=1 // pred_fallthru
      _
    // Predicated region
    $region14: #{tpu_custom_call.1} parent=1 // pred_check
      _
    $region15: #{tpu_custom_call.1} parent=1 // pred_check_branch
      %26 = sbr.rel (0) target = $region17
    $region16: #{tpu_custom_call.1} parent=1 // pred_region
      %s28 = ssub.s32 768, 768
      %29 = vsyncadd [#allocation6], %s28
      %s30 = sshll.u32 [#allocation5], 4
      %s31 = int_to_ptr.vmem [resolvable:$true] %s30
      %36 = dma.hbm_to_vmem [thread:$0]  %s3, 768, %s31, [#allocation6], 384, 384, 24
    $region17: #{tpu_custom_call.1} parent=1 // pred_fallthru
      _
    // Predicated region
    $region18: #{tpu_custom_call.1} parent=1 // pred_check
      _
    $region19: #{tpu_custom_call.1} parent=1 // pred_check_branch
      %38 = sbr.rel (0) target = $region21
    $region20: #{tpu_custom_call.1} parent=1 // pred_region
      %39 = dma.done [#allocation4], 768
    $region21: #{tpu_custom_call.1} parent=1 // pred_fallthru
      _
    // Predicated region
    $region22: #{tpu_custom_call.1} parent=1 // pred_check
      _
    $region23: #{tpu_custom_call.1} parent=1 // pred_check_branch
      %41 = sbr.rel (0) target = $region25
    $region24: #{tpu_custom_call.1} parent=1 // pred_region
      %42 = dma.done [#allocation6], 768
    $region25: #{tpu_custom_call.1} parent=1 // pred_fallthru
      _
    %p43 = scmp.eq.s32.totalorder 0, 0
    // Predicated region
    $region26: #{tpu_custom_call.1} parent=1 // pred_check
      %p44 = pneg %p43
    $region27: #{tpu_custom_call.1} parent=1 // pred_check_branch
      %46 = sbr.rel (%p44) target = $region29
    $region28: #{tpu_custom_call.1} parent=1 // pred_region
      %vm47 = vcmask 89088
      %48 = vst.msk [vmem:[#allocation2] sm:$0xff] %vm47, 0.0
    $region29: #{tpu_custom_call.1} parent=1 // pred_fallthru
      _
    %v49 = vld [vmem:[#allocation3] sm:$0xff]
    %v50 = vld [vmem:[#allocation3 + $0x8] sm:$0xff]
    %v51 = vld [vmem:[#allocation3 + $0x10] sm:$0xff]
    %v52 = vld [vmem:[#allocation3 + $0x18] sm:$0xff]
    %v53 = vld [vmem:[#allocation3 + $0x20] sm:$0xff]
    %v54 = vld [vmem:[#allocation3 + $0x28] sm:$0xff]
    %v55 = vmul.f32 %v49, 1.442695
    %v56 = vpow.pop %v55
    %v57 = vmul.f32 %v50, 1.442695
    %v58 = vpow.pop %v57
    %v59 = vmul.f32 %v51, 1.442695
    %v60 = vpow.pop %v59
    %v61 = vmul.f32 %v52, 1.442695
    %v62 = vpow.pop %v61
    %v63 = vmul.f32 %v53, 1.442695
    %v64 = vpow.pop %v63
    %v65 = vmul.f32 %v54, 1.442695
    %v66 = vpow.pop %v65
    %v67 = vld [vmem:[#allocation5] sm:$0xff]
    %v68 = vld [vmem:[#allocation5 + $0x8] sm:$0xff]
    %v69 = vld [vmem:[#allocation5 + $0x10] sm:$0xff]
    %v70 = vld [vmem:[#allocation5 + $0x18] sm:$0x33]
    %v71 = vld [vmem:[#allocation5 + $0x20] sm:$0x33]
    %v72 = vld [vmem:[#allocation5 + $0x28] sm:$0x33]
    %v73 = vunpack.c.l.bf16 %v67
    %v74 = vunpack.c.h.bf16 %v67
    %v75 = vunpack.c.l.bf16 %v68
    %v76 = vunpack.c.h.bf16 %v68
    %v77 = vunpack.c.l.bf16 %v69
    %v78 = vunpack.c.h.bf16 %v69
    %v79 = vunpack.c.l.bf16 %v70
    %v80 = vunpack.c.h.bf16 %v70
    %v81 = vunpack.c.l.bf16 %v71
    %v82 = vunpack.c.h.bf16 %v71
    %v83 = vunpack.c.l.bf16 %v72
    %v84 = vunpack.c.h.bf16 %v72
    %v85 = vld [vmem:[#allocation2] sm:$0xff]
    %86 = vmatprep.subr.mxu0 %v74
    %87 = vmatpush1.xpose.msra.mxu0 %v73
    %88 = vmatprep.subr.mxu0 %v80
    %89 = vmatpush1.xpose.msra.mxu0 %v79
    %90 = vmatprep.subr.mxu0 0.0
    %91 = vmatpush1.xpose.msra.mxu0 0.0
    %92 = vmatprep.subr.mxu0 0.0
    %93 = vmatpush1.xpose.msra.mxu0 0.0
    %94 = vmatprep.subr.mxu0 0.0
    %95 = vmatpush1.xpose.msra.mxu0 0.0
    %96 = vmatprep.subr.mxu0 0.0
    %97 = vmatpush1.xpose.msra.mxu0 0.0
    %98 = vmatprep.subr.mxu0 0.0
    %99 = vmatpush1.xpose.msra.mxu0 0.0
    %100 = vmatprep.subr.mxu0 0.0
    %101 = vmatpush1.xpose.msra.mxu0 0.0
    %102 = vmatprep.subr.mxu0 0.0
    %103 = vmatpush1.xpose.msra.mxu0 0.0
    %104 = vmatprep.subr.mxu0 0.0
    %105 = vmatpush1.xpose.msra.mxu0 0.0
    %106 = vmatprep.subr.mxu0 0.0
    %107 = vmatpush1.xpose.msra.mxu0 0.0
    %108 = vmatprep.subr.mxu0 0.0
    %109 = vmatpush1.xpose.msra.mxu0 0.0
    %110 = vmatprep.subr.mxu0 0.0
    %111 = vmatpush1.xpose.msra.mxu0 0.0
    %112 = vmatprep.subr.mxu0 0.0
    %113 = vmatpush1.xpose.msra.mxu0 0.0
    %114 = vmatprep.subr.mxu0 0.0
    %115 = vmatpush1.xpose.msra.mxu0 0.0
    %116 = vmatprep.subr.mxu0 0.0
    %117 = vmatpush1.xpose.msra.mxu0 0.0
    %118 = vmatprep.subr.mxu0 0.0
    %119 = vmatpush1.xpose.msra.mxu0 0.0
    %120 = vmatprep.subr.mxu0 0.0
    %121 = vmatpush1.xpose.msra.mxu0 0.0
    %122 = vmatprep.subr.mxu0 0.0
    %123 = vmatpush1.xpose.msra.mxu0 0.0
    %124 = vmatprep.subr.mxu0 0.0
    %125 = vmatpush1.xpose.msra.mxu0 0.0
    %126 = vmatprep.subr.mxu0 0.0
    %127 = vmatpush1.xpose.msra.mxu0 0.0
    %128 = vmatprep.subr.mxu0 0.0
    %129 = vmatpush1.xpose.msra.mxu0 0.0
    %130 = vmatprep.subr.mxu0 0.0
    %131 = vmatpush1.xpose.msra.mxu0 0.0
    %132 = vmatprep.subr.mxu0 0.0
    %133 = vmatpush1.xpose.msra.mxu0 0.0
    %134 = vmatprep.subr.mxu0 0.0
    %135 = vmatpush1.xpose.msra.mxu0 0.0
    %136 = vmatprep.subr.mxu0 0.0
    %137 = vmatpush1.xpose.msra.mxu0 0.0
    %138 = vmatprep.subr.mxu0 0.0
    %139 = vmatpush1.xpose.msra.mxu0 0.0
    %140 = vmatprep.subr.mxu0 0.0
    %141 = vmatpush1.xpose.msra.mxu0 0.0
    %142 = vmatprep.subr.mxu0 0.0
    %143 = vmatpush1.xpose.msra.mxu0 0.0
    %144 = vmatprep.subr.mxu0 0.0
    %145 = vmatpush1.xpose.msra.mxu0 0.0
    %146 = vmatprep.subr.mxu0 0.0
    %147 = vmatpush1.xpose.msra.mxu0 0.0
    %148 = vmatprep.subr.mxu0 0.0
    %149 = vmatpush1.xpose.msra.mxu0 0.0
    %150 = vmatprep.mubr.f32.mxu0 %v58
    %151 = vmatmul.mubr.f32.gmra.mrb[0].mxu0 %v56
    %v152 = vpop.f32.mrb[0].mxu0
    %v153 = vadd.f32 0.0, %v152
    %v154 = vpop.f32.mrb[0].mxu0
    %155 = vdwg.mxu0
    %156 = vmatprep.subr.mxu0 %v76
    %157 = vmatpush1.xpose.msra.mxu0 %v75
    %158 = vmatprep.subr.mxu0 %v82
    %159 = vmatpush1.xpose.msra.mxu0 %v81
    %160 = vmatprep.subr.mxu0 0.0
    %161 = vmatpush1.xpose.msra.mxu0 0.0
    %162 = vmatprep.subr.mxu0 0.0
    %163 = vmatpush1.xpose.msra.mxu0 0.0
    %164 = vmatprep.subr.mxu0 0.0
    %165 = vmatpush1.xpose.msra.mxu0 0.0
    %166 = vmatprep.subr.mxu0 0.0
    %167 = vmatpush1.xpose.msra.mxu0 0.0
    %168 = vmatprep.subr.mxu0 0.0
    %169 = vmatpush1.xpose.msra.mxu0 0.0
    %170 = vmatprep.subr.mxu0 0.0
    %171 = vmatpush1.xpose.msra.mxu0 0.0
    %172 = vmatprep.subr.mxu0 0.0
    %173 = vmatpush1.xpose.msra.mxu0 0.0
    %174 = vmatprep.subr.mxu0 0.0
    %175 = vmatpush1.xpose.msra.mxu0 0.0
    %176 = vmatprep.subr.mxu0 0.0
    %177 = vmatpush1.xpose.msra.mxu0 0.0
    %178 = vmatprep.subr.mxu0 0.0
    %179 = vmatpush1.xpose.msra.mxu0 0.0
    %180 = vmatprep.subr.mxu0 0.0
    %181 = vmatpush1.xpose.msra.mxu0 0.0
    %182 = vmatprep.subr.mxu0 0.0
    %183 = vmatpush1.xpose.msra.mxu0 0.0
    %184 = vmatprep.subr.mxu0 0.0
    %185 = vmatpush1.xpose.msra.mxu0 0.0
    %186 = vmatprep.subr.mxu0 0.0
    %187 = vmatpush1.xpose.msra.mxu0 0.0
    %188 = vmatprep.subr.mxu0 0.0
    %189 = vmatpush1.xpose.msra.mxu0 0.0
    %190 = vmatprep.subr.mxu0 0.0
    %191 = vmatpush1.xpose.msra.mxu0 0.0
    %192 = vmatprep.subr.mxu0 0.0
    %193 = vmatpush1.xpose.msra.mxu0 0.0
    %194 = vmatprep.subr.mxu0 0.0
    %195 = vmatpush1.xpose.msra.mxu0 0.0
    %196 = vmatprep.subr.mxu0 0.0
    %197 = vmatpush1.xpose.msra.mxu0 0.0
    %198 = vmatprep.subr.mxu0 0.0
    %199 = vmatpush1.xpose.msra.mxu0 0.0
    %200 = vmatprep.subr.mxu0 0.0
    %201 = vmatpush1.xpose.msra.mxu0 0.0
    %202 = vmatprep.subr.mxu0 0.0
    %203 = vmatpush1.xpose.msra.mxu0 0.0
    %204 = vmatprep.subr.mxu0 0.0
    %205 = vmatpush1.xpose.msra.mxu0 0.0
    %206 = vmatprep.subr.mxu0 0.0
    %207 = vmatpush1.xpose.msra.mxu0 0.0
    %208 = vmatprep.subr.mxu0 0.0
    %209 = vmatpush1.xpose.msra.mxu0 0.0
    %210 = vmatprep.subr.mxu0 0.0
    %211 = vmatpush1.xpose.msra.mxu0 0.0
    %212 = vmatprep.subr.mxu0 0.0
    %213 = vmatpush1.xpose.msra.mxu0 0.0
    %214 = vmatprep.subr.mxu0 0.0
    %215 = vmatpush1.xpose.msra.mxu0 0.0
    %216 = vmatprep.subr.mxu0 0.0
    %217 = vmatpush1.xpose.msra.mxu0 0.0
    %218 = vmatprep.subr.mxu0 0.0
    %219 = vmatpush1.xpose.msra.mxu0 0.0
    %220 = vmatprep.mubr.f32.mxu0 %v62
    %221 = vmatmul.mubr.f32.gmra.mrb[0].mxu0 %v60
    %v222 = vpop.f32.mrb[0].mxu0
    %v223 = vadd.f32 %v153, %v222
    %v224 = vpop.f32.mrb[0].mxu0
    %225 = vdwg.mxu0
    %226 = vmatprep.subr.mxu0 %v78
    %227 = vmatpush1.xpose.msra.mxu0 %v77
    %228 = vmatprep.subr.mxu0 %v84
    %229 = vmatpush1.xpose.msra.mxu0 %v83
    %230 = vmatprep.subr.mxu0 0.0
    %231 = vmatpush1.xpose.msra.mxu0 0.0
    %232 = vmatprep.subr.mxu0 0.0
    %233 = vmatpush1.xpose.msra.mxu0 0.0
    %234 = vmatprep.subr.mxu0 0.0
    %235 = vmatpush1.xpose.msra.mxu0 0.0
    %236 = vmatprep.subr.mxu0 0.0
    %237 = vmatpush1.xpose.msra.mxu0 0.0
    %238 = vmatprep.subr.mxu0 0.0
    %239 = vmatpush1.xpose.msra.mxu0 0.0
    %240 = vmatprep.subr.mxu0 0.0
    %241 = vmatpush1.xpose.msra.mxu0 0.0
    %242 = vmatprep.subr.mxu0 0.0
    %243 = vmatpush1.xpose.msra.mxu0 0.0
    %244 = vmatprep.subr.mxu0 0.0
    %245 = vmatpush1.xpose.msra.mxu0 0.0
    %246 = vmatprep.subr.mxu0 0.0
    %247 = vmatpush1.xpose.msra.mxu0 0.0
    %248 = vmatprep.subr.mxu0 0.0
    %249 = vmatpush1.xpose.msra.mxu0 0.0
    %250 = vmatprep.subr.mxu0 0.0
    %251 = vmatpush1.xpose.msra.mxu0 0.0
    %252 = vmatprep.subr.mxu0 0.0
    %253 = vmatpush1.xpose.msra.mxu0 0.0
    %254 = vmatprep.subr.mxu0 0.0
    %255 = vmatpush1.xpose.msra.mxu0 0.0
    %256 = vmatprep.subr.mxu0 0.0
    %257 = vmatpush1.xpose.msra.mxu0 0.0
    %258 = vmatprep.subr.mxu0 0.0
    %259 = vmatpush1.xpose.msra.mxu0 0.0
    %260 = vmatprep.subr.mxu0 0.0
    %261 = vmatpush1.xpose.msra.mxu0 0.0
    %262 = vmatprep.subr.mxu0 0.0
    %263 = vmatpush1.xpose.msra.mxu0 0.0
    %264 = vmatprep.subr.mxu0 0.0
    %265 = vmatpush1.xpose.msra.mxu0 0.0
    %266 = vmatprep.subr.mxu0 0.0
    %267 = vmatpush1.xpose.msra.mxu0 0.0
    %268 = vmatprep.subr.mxu0 0.0
    %269 = vmatpush1.xpose.msra.mxu0 0.0
    %270 = vmatprep.subr.mxu0 0.0
    %271 = vmatpush1.xpose.msra.mxu0 0.0
    %272 = vmatprep.subr.mxu0 0.0
    %273 = vmatpush1.xpose.msra.mxu0 0.0
    %274 = vmatprep.subr.mxu0 0.0
    %275 = vmatpush1.xpose.msra.mxu0 0.0
    %276 = vmatprep.subr.mxu0 0.0
    %277 = vmatpush1.xpose.msra.mxu0 0.0
    %278 = vmatprep.subr.mxu0 0.0
    %279 = vmatpush1.xpose.msra.mxu0 0.0
    %280 = vmatprep.subr.mxu0 0.0
    %281 = vmatpush1.xpose.msra.mxu0 0.0
    %282 = vmatprep.subr.mxu0 0.0
    %283 = vmatpush1.xpose.msra.mxu0 0.0
    %284 = vmatprep.subr.mxu0 0.0
    %285 = vmatpush1.xpose.msra.mxu0 0.0
    %286 = vmatprep.subr.mxu0 0.0
    %287 = vmatpush1.xpose.msra.mxu0 0.0
    %288 = vmatprep.subr.mxu0 0.0
    %289 = vmatpush1.xpose.msra.mxu0 0.0
    %290 = vmatprep.mubr.f32.mxu0 %v66
    %291 = vmatmul.mubr.f32.gmra.mrb[0].mxu0 %v64
    %v292 = vpop.f32.mrb[0].mxu0
    %v293 = vadd.f32 %v223, %v292
    %v294 = vpop.f32.mrb[0].mxu0
    %295 = vdwg.mxu0
    %v296 = vadd.f32 %v85, %v293
    %vm297 = vcmask 89088
    %298 = vst.msk [vmem:[#allocation2] sm:$0xff] %vm297, %v296
    // Predicated region
    $region30: #{tpu_custom_call.1} parent=1 // pred_check
      %p299 = pneg %p43
    $region31: #{tpu_custom_call.1} parent=1 // pred_check_branch
      %301 = sbr.rel (%p299) target = $region33
    $region32: #{tpu_custom_call.1} parent=1 // pred_region
      %v302 = vld [vmem:[#allocation2] sm:$0xff]
      %v303 = vld [vmem:[%s1] sm:$0xff]
      %v304 = vld [vmem:[%s2] sm:$0xff]
      %v305 = vmul.f32 %v304, %v302
      %v306 = vsel %vm297, %v305, 0.0
      %307 = vadd.xlane.f32.xlu0 %v306
      %v308 = vpop.xlane.xlu0 %307
      %v309 = vrcp.pop 20.0
      %v310 = vmul.f32 %v308, %v309
      %v311 = vsub.f32 %v310, %v303
      %313 = vrot.lane.b32.xlu0 %v303, 10
      %v314 = vpop.permute.xlu0 %313
      %v316 = vsub.f32 %v302, %v314
      %318 = vrot.lane.b32.xlu0 %v311, 10
      %v319 = vpop.permute.xlu0 %318
      %v321 = vsub.f32 %v316, %v319
      %v322 = vmul.f32 %v311, 0.60653067
      %324 = vrot.lane.b32.xlu0 %v322, 10
      %v325 = vpop.permute.xlu0 %324
      %v327 = vadd.f32 %v321, %v325
      %329 = vrot.lane.b32.xlu0 %v327, 118
      %v330 = vpop.permute.xlu0 %329
      %v332 = vrcp.pop %v330
      %v333 = vmul.f32 %v322, %v332
      %vm334 = vcmp.ne.f32.partialorder %v333, 0.0
      %v335 = vlog2.pop %v333
      %v336 = vmul.f32 %v335, 0.6931472
      %v337 = vsel %vm334, %v336, 0.0
      %vm338 = vcmask 7168
      %339 = vst.msk [vmem:[%s4] sm:$0xff] %vm338, %v337
    $region33: #{tpu_custom_call.1} parent=1 // pred_fallthru
      _
    // Predicated region
    $region34: #{tpu_custom_call.1} parent=1 // pred_check
      _
    $region35: #{tpu_custom_call.1} parent=1 // pred_check_branch
      %341 = sbr.rel (0) target = $region37
    $region36: #{tpu_custom_call.1} parent=1 // pred_region
      _
    $region37: #{tpu_custom_call.1} parent=1 // pred_fallthru
      _
    // Predicated region
    $region38: #{tpu_custom_call.1} parent=1 // pred_check
      _
    $region39: #{tpu_custom_call.1} parent=1 // pred_check_branch
      %343 = sbr.rel (0) target = $region41
    $region40: #{tpu_custom_call.1} parent=1 // pred_region
      _
    $region41: #{tpu_custom_call.1} parent=1 // pred_fallthru
      _
    %344 = vsyncpa [#allocation4], 1
    %345 = vsyncpa [#allocation6], 1

</llo_original>
